<compile_context>
chip_gen: v6e
topology: v6e:2x2x1
jax: 0.10.0
libtpu: 0.0.40
codegen_flags: <defaults>
</compile_context>

<pallas_src>
import math

import jax
import jax.numpy as jnp
from jax.experimental import pallas as pl
from jax.experimental.pallas import tpu as pltpu

_MIB = 1024 * 1024


def _copy_kernel(x_ref, o_ref):
    # Downsampling is done entirely by the BlockSpec geometry: x_ref already
    # holds only the kept rows (first lanes of the folded view).  Trim any
    # lane padding and store a dense block.
    o_ref[...] = x_ref[:, : o_ref.shape[1]]


def _round_up(v, m):
    return -(-v // m) * m


def _vmem_limits():
    """Generation-aware VMEM limit / block budget (v5e/v6e 128 MiB, v7x 64 MiB)."""
    try:
        cap = int(pltpu.get_tpu_info().vmem_capacity_bytes)
    except Exception:  # conservative default if query unavailable
        cap = 64 * _MIB
    limit = min(64 * _MIB, (cap * 3) // 4)       # 64 MiB on v5e/v6e, 48 MiB on v7x
    budget = max(16 * _MIB, limit - 16 * _MIB)   # working-set budget w/ headroom
    return limit, budget


def downsample(x, index: int, *, block_rows=None):
    """Every (index+1)-th element along the leading axis (torch x[::index+1]).

    `index` must be a static Python int.  `block_rows` optionally overrides
    the row-tile size (testing / tuning only).
    """
    stride = int(index) + 1
    if stride == 1:
        return x  # identity slice: zero HBM traffic.

    orig_shape = tuple(x.shape)
    n_in = orig_shape[0]
    n_out = -(-n_in // stride)
    d = math.prod(orig_shape[1:]) if len(orig_shape) > 1 else 1
    out_shape = (n_out,) + orig_shape[1:]
    itemsize = jnp.dtype(x.dtype).itemsize

    # Fallbacks where a Pallas kernel cannot beat XLA's native strided slice:
    #  * d < 128: every store would be a mostly-masked lane write (4-5x cost).
    #  * ragged leading dim: the zero-copy folded view needs N % stride == 0.
    # TODO(synk): the ragged-N case could stay in Pallas with a manual
    # strided-source DMA (memory_space=pl.ANY + make_async_copy with a strided
    # pl.ds) covering the tail row; XLA's slice is already ~roofline there.
    if d < 128 or n_in % stride != 0 or n_out == 0:
        return x[::stride]

    x2 = x.reshape(n_in, d)
    folded = x2.reshape(n_out, stride * d)       # zero-copy bitcast reshape

    sub_mult = 8 * max(1, 4 // itemsize)         # 8 f32 / 16 bf16 / 32 int8
    d_pad = _round_up(d, 128)
    vmem_limit, budget = _vmem_limits()

    # Lane tile: prefer the full feature width (one contiguous burst per kept
    # row); only split lanes if that would force the row tile below ~256 rows.
    row_cost = 4 * itemsize                      # in + out block, double-buffered
    if d_pad * row_cost * min(256, _round_up(n_out, sub_mult)) <= budget:
        td = d_pad
    else:
        td = max(128, (budget // (row_cost * 256)) // 128 * 128)
        td = min(td, d_pad)
    grid_d = -(-d // td)

    # Row tile: biggest sublane-packed multiple fitting the budget; ~1K rows is
    # already on the measured HBM-roofline plateau.
    tm = budget // (row_cost * td)
    tm = max(sub_mult, min(1024, (tm // sub_mult) * sub_mult))
    if block_rows is not None:
        tm = max(sub_mult, _round_up(int(block_rows), sub_mult))
    if tm >= n_out:
        tm = n_out                               # single full-dim row block
        # Keep >= 2 grid steps on meaningful sizes so v7x's two TensorCores
        # both get work (both grid axes are "parallel").
        if (grid_d == 1 and n_out * d * itemsize >= 4 * _MIB
                and n_out >= 2 * sub_mult):
            half = _round_up(-(-n_out // 2), sub_mult)
            if half < n_out:
                tm = half
    grid_m = -(-n_out // tm)

    td_out = d if grid_d == 1 else td
    bytes_accessed = (n_out * d + n_out * min(grid_d * td, d_pad)) * itemsize

    out2 = pl.pallas_call(
        _copy_kernel,
        out_shape=jax.ShapeDtypeStruct((n_out, d), x.dtype),
        grid=(grid_m, grid_d),
        in_specs=[
            # Row-block i of the folded view: its first d columns are exactly
            # source rows i*tm*stride, (i*tm+1)*stride, ... so the DMA fetches
            # only the kept rows (row pitch = stride*d elements, no over-read).
            pl.BlockSpec((tm, td), lambda i, j: (i, j)),
        ],
        out_specs=pl.BlockSpec((tm, td_out), lambda i, j: (i, j)),
        compiler_params=pltpu.CompilerParams(
            dimension_semantics=("parallel", "parallel"),
            vmem_limit_bytes=vmem_limit,
        ),
        cost_estimate=pl.CostEstimate(
            flops=0, transcendentals=0, bytes_accessed=bytes_accessed),
    )(folded)

    return out2.reshape(out_shape)


if __name__ == "__main__":
    root = jax.random.PRNGKey(0)
    k0, k1, k2, k3, k4, k5 = jax.random.split(root, 6)

    # Primary example: NCHW-style tensor; Downsample slices the leading axis.
    x = jax.random.normal(k0, (8, 4, 16, 16), dtype=jnp.float32)
    y = jax.block_until_ready(downsample(x, 1))          # stride 2
    y_ref = x[::2]
    assert y.shape == y_ref.shape, (y.shape, y_ref.shape)
    assert jnp.array_equal(y, y_ref), "mismatch vs reference strided slice"

    # index = 0 -> identity short-circuit (no kernel launched).
    y0 = jax.block_until_ready(downsample(x, 0))
    assert y0.shape == x.shape and jnp.array_equal(y0, x), "identity mismatch"

    # Multi-row-block path with a ragged final block (500 = 7*64 + 52 rows).
    x_big = jax.random.normal(k1, (1000, 256), dtype=jnp.float32)
    y_big = jax.block_until_ready(downsample(x_big, 1, block_rows=64))
    assert jnp.array_equal(y_big, x_big[::2]), "mismatch on ragged multi-block"

    # Larger stride, divisible leading dim (exact-read Pallas path).
    x_s4 = jax.random.normal(k2, (120, 4, 16, 16), dtype=jnp.float32)
    y_s4 = jax.block_until_ready(downsample(x_s4, 3))
    assert jnp.array_equal(y_s4, x_s4[::4]), "mismatch on stride-4 case"

    # Packed dtype (bf16, sublane packing multiple of 16).
    x_bf = jax.random.normal(k3, (64, 4, 16, 16), dtype=jnp.bfloat16)
    y_bf = jax.block_until_ready(downsample(x_bf, 1))
    assert jnp.array_equal(y_bf, x_bf[::2]), "mismatch on bf16 case"

    # Feature width not a multiple of 128 (lane-trim path: d = 400).
    x_odd_d = jax.random.normal(k4, (16, 4, 10, 10), dtype=jnp.float32)
    y_odd_d = jax.block_until_ready(downsample(x_odd_d, 1))
    assert jnp.array_equal(y_odd_d, x_odd_d[::2]), "mismatch on d=400 case"

    # Fallback paths: ragged leading dim (100 % 3 != 0) and tiny feature dim.
    x_rag = jax.random.normal(k5, (100, 4, 16, 16), dtype=jnp.float32)
    y_rag = jax.block_until_ready(downsample(x_rag, 2))
    assert jnp.array_equal(y_rag, x_rag[::3]), "mismatch on ragged-N fallback"
    x_1d = jnp.arange(37, dtype=jnp.float32)
    y_1d = jax.block_until_ready(downsample(x_1d, 1))
    assert jnp.array_equal(y_1d, x_1d[::2]), "mismatch on 1-D fallback"

    print("KERNEL_OK")
</pallas_src>

<mosaic_0001>
module attributes {stable_mosaic.version = 11 : i64} {
  func.func @_copy_kernel(%arg0: i32, %arg1: i32, %arg2: memref<4x1024xf32, #tpu.memory_space<vmem>>, %arg3: memref<4x1024xf32, #tpu.memory_space<vmem>>) attributes {dimension_semantics = [#tpu.dimension_semantics<parallel>, #tpu.dimension_semantics<parallel>], iteration_bounds = array<i64: 1, 1>, scalar_prefetch = 0 : i64, scratch_operands = 0 : i64, tpu.core_type = #tpu.core_type<tc>, window_params = [{transform_indices = @transform_0, window_bounds = array<i64: 4, 1024>}, {transform_indices = @transform_1, window_bounds = array<i64: 4, 1024>}]} {
    %c0 = arith.constant 0 : index
    %c0_0 = arith.constant 0 : index
    %0 = vector.load %arg2[%c0, %c0_0] : memref<4x1024xf32, #tpu.memory_space<vmem>>, vector<4x1024xf32>
    %c0_1 = arith.constant 0 : index
    %c0_2 = arith.constant 0 : index
    %1 = vector.load %arg3[%c0_1, %c0_2] : memref<4x1024xf32, #tpu.memory_space<vmem>>, vector<4x1024xf32>
    tpu.vector_store %arg3[%c0_1, %c0_2], %0 {strides = array<i32>} : memref<4x1024xf32, #tpu.memory_space<vmem>>, vector<4x1024xf32>,
    return
  }
  func.func @transform_0(%arg0: i32, %arg1: i32) -> (i32, i32) {
    %c0_i32 = arith.constant 0 : i32
    return %arg0, %arg1 : i32, i32
  }
  func.func @transform_1(%arg0: i32, %arg1: i32) -> (i32, i32) {
    %c0_i32 = arith.constant 0 : i32
    return %arg0, %arg1 : i32, i32
  }
}

</mosaic_0001>

<llo_original>
// kernel: tpu_custom_call.1
$region0: #{tpu_custom_call.1}
  #allocation0 [shape = 'u32[]', space=smem, size = 0x4, offset = 0x4, fixed_abs, tag = 'smem constant byte address 0x4 - core index']
  #allocation1 [shape = 'u32[144,128]{1,0:T(1,128)}', space=vmem, size = 0x12000, scoped, tag = 'internal scratch']
  %s0 = inlined_call_operand.hbm [shape: f32[4,2048], index: 0, kind: input, shape index: {}]
  %s1 = inlined_call_operand.hbm [shape: f32[4,1024], index: 1, kind: output, shape index: {}]
  %s2 = sld [smem:[#allocation0]]
  $region18: #{tpu_custom_call.1} parent=0
    _
  %s4 = ssub.s32 1, %s2
  %s5 = scalar_select 0, %s4, %s2
  $region1: #{tpu_custom_call.1} parent=0
    #allocation2 [shape = 'u8[16384]{0}', space=vmem, size = 0x4000, scoped, tag = 'input window, operand 0, single buffered']
    #allocation3 [shape = 's32[1]{0}', space=sflag, size = 0x4, scoped, tag = 'scoped memory for tpu_custom_call.1']
    #allocation4 [shape = 's32[1]{0}', space=sflag, size = 0x4, scoped, tag = 'scoped memory for tpu_custom_call.1']
    #allocation5 [shape = 'u8[16384]{0}', space=vmem, size = 0x4000, scoped, tag = 'output window, operand 0, single buffered']
    %6 = vsyncpa [#allocation3], 0
    %7 = vsyncpa [#allocation4], 0
    // Predicated region
    $region2: #{tpu_custom_call.1} parent=1 // pred_check
      _
    $region3: #{tpu_custom_call.1} parent=1 // pred_check_branch
      %9 = sbr.rel (0) target = $region5
    $region4: #{tpu_custom_call.1} parent=1 // pred_region
      %s11 = ssub.s32 512, 512
      %12 = vsyncadd [#allocation3], %s11
      %s14 = sshll.u32 [#allocation2], 4
      %s15 = int_to_ptr.vmem [resolvable:$true] %s14
      %17 = dma.hbm_to_vmem [thread:$0]  %s0, 512, %s15, [#allocation3]
    $region5: #{tpu_custom_call.1} parent=1 // pred_fallthru
      _
    // Predicated region
    $region6: #{tpu_custom_call.1} parent=1 // pred_check
      _
    $region7: #{tpu_custom_call.1} parent=1 // pred_check_branch
      %19 = sbr.rel (0) target = $region9
    $region8: #{tpu_custom_call.1} parent=1 // pred_region
      %20 = dma.done [#allocation3], 512
    $region9: #{tpu_custom_call.1} parent=1 // pred_fallthru
      _
    %v21 = vld [vmem:[#allocation2] sm:$0xff]
    %v22 = vld [vmem:[#allocation2 + $0x8] sm:$0xff]
    %v23 = vld [vmem:[#allocation2 + $0x10] sm:$0xff]
    %v24 = vld [vmem:[#allocation2 + $0x18] sm:$0xff]
    %25 = vst [vmem:[#allocation5] sm:$0xff] %v21
    %26 = vst [vmem:[#allocation5 + $0x8] sm:$0xff] %v22
    %27 = vst [vmem:[#allocation5 + $0x10] sm:$0xff] %v23
    %28 = vst [vmem:[#allocation5 + $0x18] sm:$0xff] %v24
    // Predicated region
    $region10: #{tpu_custom_call.1} parent=1 // pred_check
      _
    $region11: #{tpu_custom_call.1} parent=1 // pred_check_branch
      %30 = sbr.rel (0) target = $region13
    $region12: #{tpu_custom_call.1} parent=1 // pred_region
      %s32 = ssub.s32 512, 512
      %33 = vsyncadd [#allocation4], %s32
      %s35 = sshll.u32 [#allocation5], 4
      %s36 = int_to_ptr.vmem [resolvable:$true] %s35
      %38 = dma.vmem_to_hbm [thread:$0]  %s36, 512, %s1, [#allocation4]
    $region13: #{tpu_custom_call.1} parent=1 // pred_fallthru
      _
    // Predicated region
    $region14: #{tpu_custom_call.1} parent=1 // pred_check
      _
    $region15: #{tpu_custom_call.1} parent=1 // pred_check_branch
      %40 = sbr.rel (0) target = $region17
    $region16: #{tpu_custom_call.1} parent=1 // pred_region
      %41 = dma.done [#allocation4], 512
    $region17: #{tpu_custom_call.1} parent=1 // pred_fallthru
      _
    %42 = vsyncpa [#allocation3], 1
    %43 = vsyncpa [#allocation4], 1

</llo_original>
